<compile_context>
chip_gen: v5e
topology: v5e:2x2
jax: 0.10.0
libtpu: 0.0.40
codegen_flags: <defaults>
</compile_context>

<pallas_src>
from functools import partial

import jax
import jax.numpy as jnp
from jax.experimental import pallas as pl
from jax.experimental.pallas import tpu as pltpu

_LANE = 128
_TARGET_TILE_HW = 2048          # lanes per block (swept-reasonable default)
_IN_TILE_BYTE_BUDGET = 2 << 20  # per-block input bytes (keeps dbuf'd VMEM small)
_VMEM_LIMIT_BYTES = 48 << 20    # explicit scoped VMEM; < v7x 64 MiB physical


def _prenorm_layernorm_kernel(x_ref, g_ref, b_ref, o_ref, *, eps, fuse_fn):
    # x_ref: (NB, C, TILE_HW); g_ref/b_ref: (1, C, 1)
    x = x_ref[...].astype(jnp.float32)
    mean = jnp.mean(x, axis=1, keepdims=True)            # (NB, 1, T)
    xm = x - mean                                        # reused for var and y
    var = jnp.mean(xm * xm, axis=1, keepdims=True)       # unbiased=False
    inv = pl.reciprocal(jnp.sqrt(var) + eps, approx=False)  # one recip per column
    g = g_ref[...].astype(jnp.float32)                   # (1, C, 1) -> broadcast
    b = b_ref[...].astype(jnp.float32)
    y = xm * inv * g + b
    if fuse_fn is not None:
        y = fuse_fn(y)                                   # fused elementwise fn
    o_ref[...] = y.astype(o_ref.dtype)


def _round_up(v, m):
    return (v + m - 1) // m * m


def channel_layernorm(x, g, b, eps=1e-5, fuse_fn=None):
    """x: (N, C, H, W) NCHW; g, b: (1, C, 1, 1). Returns (N, C, H, W).

    If `fuse_fn` is given it must be an elementwise JAX callable; it is applied
    to the normalized block inside the kernel (saves one HBM read+write).
    """
    N, C, H, W = x.shape
    HW = H * W
    itemsize = jnp.dtype(x.dtype).itemsize

    # --- lane-axis tiling: TILE_HW multiple of 128, pad HW up to a tile multiple
    tile_hw = min(_TARGET_TILE_HW, _round_up(HW, _LANE))
    hw_pad = _round_up(HW, tile_hw)

    # --- batch packing: largest divisor of N that keeps the input tile small
    nb = 1
    for cand in range(N, 0, -1):
        if N % cand == 0 and cand * C * tile_hw * itemsize <= _IN_TILE_BYTE_BUDGET:
            nb = cand
            break

    x_flat = x.reshape(N, C, HW)
    if hw_pad != HW:
        x_flat = jnp.pad(x_flat, ((0, 0), (0, 0), (0, hw_pad - HW)))
    g_flat = g.reshape(1, C, 1)
    b_flat = b.reshape(1, C, 1)

    grid = (N // nb, hw_pad // tile_hw)

    out = pl.pallas_call(
        partial(_prenorm_layernorm_kernel, eps=eps, fuse_fn=fuse_fn),
        out_shape=jax.ShapeDtypeStruct((N, C, hw_pad), x.dtype),
        grid_spec=pltpu.PrefetchScalarGridSpec(
            num_scalar_prefetch=0,
            grid=grid,
            in_specs=[
                pl.BlockSpec((nb, C, tile_hw), lambda n, t: (n, 0, t)),
                pl.BlockSpec((1, C, 1), lambda n, t: (0, 0, 0)),
                pl.BlockSpec((1, C, 1), lambda n, t: (0, 0, 0)),
            ],
            out_specs=pl.BlockSpec((nb, C, tile_hw), lambda n, t: (n, 0, t)),
        ),
        compiler_params=pltpu.CompilerParams(
            dimension_semantics=("parallel", "parallel"),
            vmem_limit_bytes=_VMEM_LIMIT_BYTES,
        ),
    )(x_flat, g_flat, b_flat)

    if hw_pad != HW:
        out = out[:, :, :HW]
    return out.reshape(N, C, H, W)


def prenorm(x, g, b, fn, eps=1e-5, **kwargs):
    """PreNorm.forward: fn(LayerNorm(x), **kwargs). LayerNorm runs in Pallas."""
    # TODO(synk): `fn` is an arbitrary injected nn.Module in the original code;
    # here it is a plain JAX callable applied after the Pallas norm kernel.
    # (If `fn` is purely elementwise, pass it as `fuse_fn=` to channel_layernorm
    # instead to fuse it into the kernel and halve HBM traffic.)
    return fn(channel_layernorm(x, g, b, eps=eps), **kwargs)


def _reference(x, g, b, eps=1e-5):
    x32 = x.astype(jnp.float32)
    mean = jnp.mean(x32, axis=1, keepdims=True)
    var = jnp.var(x32, axis=1, keepdims=True)  # ddof=0 == unbiased=False
    std = jnp.sqrt(var)
    return ((x32 - mean) / (std + eps) * g.astype(jnp.float32)
            + b.astype(jnp.float32)).astype(x.dtype)


if __name__ == "__main__":
    key = jax.random.PRNGKey(0)
    kx, kg, kb = jax.random.split(key, 3)

    N, C, H, W = 2, 4, 16, 16
    x = jax.random.normal(kx, (N, C, H, W), dtype=jnp.float32)

    # LayerNorm params: g = ones(1,C,1,1), b = zeros(1,C,1,1) with deterministic
    # perturbations so the affine path is actually exercised.
    g = jnp.ones((1, C, 1, 1), jnp.float32) + 0.1 * jax.random.normal(kg, (1, C, 1, 1))
    b = jnp.zeros((1, C, 1, 1), jnp.float32) + 0.1 * jax.random.normal(kb, (1, C, 1, 1))

    # fn: the wrapped module (identity here; any JAX callable works).
    fn = lambda y: y

    out = prenorm(x, g, b, fn)
    out = jax.block_until_ready(out)

    ref = fn(_reference(x, g, b))
    assert out.shape == (N, C, H, W)
    assert jnp.allclose(out, ref, atol=1e-5, rtol=1e-5), "mismatch vs reference"

    # Also exercise the non-128-aligned HW padding path + in-kernel fn fusion.
    H2, W2 = 7, 7
    x2 = jax.random.normal(kx, (3, C, H2, W2), dtype=jnp.float32)
    out2 = jax.block_until_ready(
        channel_layernorm(x2, g, b, fuse_fn=jax.nn.gelu))
    ref2 = jax.nn.gelu(_reference(x2, g, b))
    assert out2.shape == (3, C, H2, W2)
    assert jnp.allclose(out2, ref2, atol=1e-5, rtol=1e-5), "padded/fused mismatch"

    print("KERNEL_OK")
</pallas_src>

<mosaic_0001>
module attributes {stable_mosaic.version = 11 : i64} {
  func.func @_prenorm_layernorm_kernel(%arg0: i32, %arg1: i32, %arg2: memref<2x4x256xf32, #tpu.memory_space<vmem>>, %arg3: memref<1x4x1xf32, #tpu.memory_space<vmem>>, %arg4: memref<1x4x1xf32, #tpu.memory_space<vmem>>, %arg5: memref<2x4x256xf32, #tpu.memory_space<vmem>>) attributes {dimension_semantics = [#tpu.dimension_semantics<parallel>, #tpu.dimension_semantics<parallel>], iteration_bounds = array<i64: 1, 1>, scalar_prefetch = 0 : i64, scratch_operands = 0 : i64, tpu.core_type = #tpu.core_type<tc>, window_params = [{transform_indices = @transform_0, window_bounds = array<i64: 2, 4, 256>}, {pipeline_mode = #tpu.pipeline_mode<synchronous>, transform_indices = @transform_1, window_bounds = array<i64: 1, 4, 1>}, {pipeline_mode = #tpu.pipeline_mode<synchronous>, transform_indices = @transform_2, window_bounds = array<i64: 1, 4, 1>}, {transform_indices = @transform_3, window_bounds = array<i64: 2, 4, 256>}]} {
    %c0 = arith.constant 0 : index
    %c0_0 = arith.constant 0 : index
    %c0_1 = arith.constant 0 : index
    %0 = vector.load %arg2[%c0, %c0_0, %c0_1] : memref<2x4x256xf32, #tpu.memory_space<vmem>>, vector<2x4x256xf32>
    %cst = arith.constant dense<0.000000e+00> : vector<2x256xf32>
    %1 = vector.multi_reduction <add>, %0, %cst [1] : vector<2x4x256xf32> to vector<2x256xf32>
    %2 = vector.shape_cast %1 : vector<2x256xf32> to vector<2x1x256xf32>
    %cst_2 = arith.constant 4.000000e+00 : f32
    %3 = vector.broadcast %cst_2 : f32 to vector<2x1x256xf32>
    %4 = arith.divf %2, %3 : vector<2x1x256xf32>
    %5 = vector.broadcast %4 : vector<2x1x256xf32> to vector<2x4x256xf32>
    %6 = arith.subf %0, %5 : vector<2x4x256xf32>
    %7 = arith.mulf %6, %6 : vector<2x4x256xf32>
    %cst_3 = arith.constant dense<0.000000e+00> : vector<2x256xf32>
    %8 = vector.multi_reduction <add>, %7, %cst_3 [1] : vector<2x4x256xf32> to vector<2x256xf32>
    %9 = vector.shape_cast %8 : vector<2x256xf32> to vector<2x1x256xf32>
    %cst_4 = arith.constant 4.000000e+00 : f32
    %10 = vector.broadcast %cst_4 : f32 to vector<2x1x256xf32>
    %11 = arith.divf %9, %10 : vector<2x1x256xf32>
    %12 = math.sqrt %11 : vector<2x1x256xf32>
    %cst_5 = arith.constant 9.99999974E-6 : f32
    %13 = vector.broadcast %cst_5 : f32 to vector<2x1x256xf32>
    %14 = arith.addf %12, %13 : vector<2x1x256xf32>
    %15 = tpu.reciprocal %14 : vector<2x1x256xf32> -> vector<2x1x256xf32>
    %c0_6 = arith.constant 0 : index
    %c0_7 = arith.constant 0 : index
    %c0_8 = arith.constant 0 : index
    %16 = vector.load %arg3[%c0_6, %c0_7, %c0_8] : memref<1x4x1xf32, #tpu.memory_space<vmem>>, vector<1x4x1xf32>
    %c0_9 = arith.constant 0 : index
    %c0_10 = arith.constant 0 : index
    %c0_11 = arith.constant 0 : index
    %17 = vector.load %arg4[%c0_9, %c0_10, %c0_11] : memref<1x4x1xf32, #tpu.memory_space<vmem>>, vector<1x4x1xf32>
    %18 = vector.broadcast %15 : vector<2x1x256xf32> to vector<2x4x256xf32>
    %19 = arith.mulf %6, %18 : vector<2x4x256xf32>
    %20 = vector.broadcast %16 : vector<1x4x1xf32> to vector<2x4x256xf32>
    %21 = arith.mulf %19, %20 : vector<2x4x256xf32>
    %22 = vector.broadcast %17 : vector<1x4x1xf32> to vector<2x4x256xf32>
    %23 = arith.addf %21, %22 : vector<2x4x256xf32>
    %c0_12 = arith.constant 0 : index
    %c0_13 = arith.constant 0 : index
    %c0_14 = arith.constant 0 : index
    %24 = vector.load %arg5[%c0_12, %c0_13, %c0_14] : memref<2x4x256xf32, #tpu.memory_space<vmem>>, vector<2x4x256xf32>
    tpu.vector_store %arg5[%c0_12, %c0_13, %c0_14], %23 {strides = array<i32>} : memref<2x4x256xf32, #tpu.memory_space<vmem>>, vector<2x4x256xf32>,
    return
  }
  func.func @transform_0(%arg0: i32, %arg1: i32) -> (i32, i32, i32) {
    %c0_i32 = arith.constant 0 : i32
    %c0_i32_0 = arith.constant 0 : i32
    return %arg0, %c0_i32, %arg1 : i32, i32, i32
  }
  func.func @transform_1(%arg0: i32, %arg1: i32) -> (i32, i32, i32) {
    %c0_i32 = arith.constant 0 : i32
    %c0_i32_0 = arith.constant 0 : i32
    %c0_i32_1 = arith.constant 0 : i32
    %c0_i32_2 = arith.constant 0 : i32
    return %c0_i32, %c0_i32_0, %c0_i32_1 : i32, i32, i32
  }
  func.func @transform_2(%arg0: i32, %arg1: i32) -> (i32, i32, i32) {
    %c0_i32 = arith.constant 0 : i32
    %c0_i32_0 = arith.constant 0 : i32
    %c0_i32_1 = arith.constant 0 : i32
    %c0_i32_2 = arith.constant 0 : i32
    return %c0_i32, %c0_i32_0, %c0_i32_1 : i32, i32, i32
  }
  func.func @transform_3(%arg0: i32, %arg1: i32) -> (i32, i32, i32) {
    %c0_i32 = arith.constant 0 : i32
    %c0_i32_0 = arith.constant 0 : i32
    return %arg0, %c0_i32, %arg1 : i32, i32, i32
  }
}

</mosaic_0001>

<llo_original>
// kernel: tpu_custom_call.1
$region0: #{tpu_custom_call.1}
  #allocation0 [shape = 'u32[]', space=smem, size = 0x4, offset = 0x4, fixed_abs, tag = 'smem constant byte address 0x4 - core index']
  #allocation1 [shape = 'u32[72,128]{1,0:T(1,128)}', space=vmem, size = 0x9000, scoped, tag = 'internal scratch']
  %s0 = inlined_call_operand.hbm [shape: f32[2,4,256], index: 0, kind: input, shape index: {}]
  %s1 = inlined_call_operand.vmem [shape: f32[1,4,1], index: 1, kind: input, shape index: {}]
  %s2 = inlined_call_operand.vmem [shape: f32[1,4,1], index: 2, kind: input, shape index: {}]
  %s3 = inlined_call_operand.hbm [shape: f32[2,4,256], index: 3, kind: output, shape index: {}]
  %s4 = sld [smem:[#allocation0]]
  $region26: #{tpu_custom_call.1} parent=0
    _
  %s6 = ssub.s32 1, %s4
  %s7 = scalar_select 0, %s6, %s4
  $region1: #{tpu_custom_call.1} parent=0
    #allocation2 [shape = 'u8[8192]{0}', space=vmem, size = 0x2000, scoped, tag = 'input window, operand 0, single buffered']
    #allocation3 [shape = 's32[1]{0}', space=sflag, size = 0x4, scoped, tag = 'scoped memory for tpu_custom_call.1']
    #allocation4 [shape = 's32[1]{0}', space=sflag, size = 0x4, scoped, tag = 'scoped memory for tpu_custom_call.1']
    #allocation5 [shape = 'u8[8192]{0}', space=vmem, size = 0x2000, scoped, tag = 'output window, operand 0, single buffered']
    %8 = vsyncpa [#allocation3], 0
    %9 = vsyncpa [#allocation4], 0
    // Predicated region
    $region2: #{tpu_custom_call.1} parent=1 // pred_check
      _
    $region3: #{tpu_custom_call.1} parent=1 // pred_check_branch
      %11 = sbr.rel (0) target = $region5
    $region4: #{tpu_custom_call.1} parent=1 // pred_region
      %13 = vsyncadd [#allocation3], 0
      %s14 = sshll.u32 %s0, 4
      %s15 = int_to_ptr.hbm [resolvable:$true] %s14
      %s16 = sshll.u32 [#allocation2], 4
      %s17 = int_to_ptr.vmem [resolvable:$true] %s16
      %22 = dma.hbm_to_vmem [thread:$0]  %s15, 256, %s17, [#allocation3], 128, 128, 8
    $region5: #{tpu_custom_call.1} parent=1 // pred_fallthru
      _
    // Predicated region
    $region6: #{tpu_custom_call.1} parent=1 // pred_check
      _
    $region7: #{tpu_custom_call.1} parent=1 // pred_check_branch
      %24 = sbr.rel (0) target = $region9
    $region8: #{tpu_custom_call.1} parent=1 // pred_region
      _
    $region9: #{tpu_custom_call.1} parent=1 // pred_fallthru
      _
    // Predicated region
    $region10: #{tpu_custom_call.1} parent=1 // pred_check
      _
    $region11: #{tpu_custom_call.1} parent=1 // pred_check_branch
      %26 = sbr.rel (0) target = $region13
    $region12: #{tpu_custom_call.1} parent=1 // pred_region
      _
    $region13: #{tpu_custom_call.1} parent=1 // pred_fallthru
      _
    // Predicated region
    $region14: #{tpu_custom_call.1} parent=1 // pred_check
      _
    $region15: #{tpu_custom_call.1} parent=1 // pred_check_branch
      %28 = sbr.rel (0) target = $region17
    $region16: #{tpu_custom_call.1} parent=1 // pred_region
      %30 = dma.done [#allocation3], 256
    $region17: #{tpu_custom_call.1} parent=1 // pred_fallthru
      _
    %v31 = vld [vmem:[#allocation2] sm:$0xff]
    %v32 = vld [vmem:[#allocation2 + $0x8] sm:$0xff]
    %35 = vst [vmem:[#allocation1] ss:$2 sm:$0xff] %v31
    %v36 = vld.sshfl [vmem:[#allocation1] sm:$0xff pattern:$0x75316420]
    %v37 = vld.sshfl [vmem:[#allocation1 + $0x8] sm:$0xff pattern:$0x75316420]
    %s38 = scalar_lea.vmem [#allocation1], 16
    %39 = vst [vmem:[%s38] ss:$2 sm:$0xff] %v32
    %v40 = vld.sshfl [vmem:[#allocation1 + $0x10] sm:$0xff pattern:$0x75316420]
    %v41 = vld.sshfl [vmem:[#allocation1 + $0x18] sm:$0xff pattern:$0x75316420]
    %vm46 = vcmask 1043456
    %v47 = vsel %vm46, %v36, 0.0
    %v48 = vrot.slane %v47, 4
    %v49 = vadd.f32 %v47, %v48
    %v50 = vrot.slane %v49, 2
    %v51 = vadd.f32 %v49, %v50
    %v52 = vrot.slane %v51, 1
    %v53 = vadd.f32 %v51, %v52
    %v54 = vsel %vm46, %v37, 0.0
    %v55 = vrot.slane %v54, 4
    %v56 = vadd.f32 %v54, %v55
    %v57 = vrot.slane %v56, 2
    %v58 = vadd.f32 %v56, %v57
    %v59 = vrot.slane %v58, 1
    %v60 = vadd.f32 %v58, %v59
    %v61 = vsel %vm46, %v40, 0.0
    %v62 = vrot.slane %v61, 4
    %v63 = vadd.f32 %v61, %v62
    %v64 = vrot.slane %v63, 2
    %v65 = vadd.f32 %v63, %v64
    %v66 = vrot.slane %v65, 1
    %v67 = vadd.f32 %v65, %v66
    %v68 = vsel %vm46, %v41, 0.0
    %v69 = vrot.slane %v68, 4
    %v70 = vadd.f32 %v68, %v69
    %v71 = vrot.slane %v70, 2
    %v72 = vadd.f32 %v70, %v71
    %v73 = vrot.slane %v72, 1
    %v74 = vadd.f32 %v72, %v73
    %v75 = vrcp.pop 4.0
    %v76 = vmul.f32 4.0, %v75
    %v77 = vsub.f32 1.0, %v76
    %v78 = vmul.f32 %v75, %v77
    %v79 = vadd.f32 %v75, %v78
    %vm80 = vweird.f32 %v75
    %v81 = vsel %vm80, %v75, %v79
    %v82 = vmul.f32 %v53, %v81
    %v83 = vmul.f32 %v60, %v81
    %v84 = vmul.f32 %v67, %v81
    %v85 = vmul.f32 %v74, %v81
    %v90 = vrot.slane %v83, 4
    %v91 = vrot.slane %v85, 4
    %v92 = vsel %vm46, %v82, %v90
    %v93 = vsel %vm46, %v84, %v91
    %v96 = vsub.f32 %v31, %v92
    %v97 = vsub.f32 %v32, %v93
    %v98 = vmul.f32 %v96, %v96
    %v99 = vmul.f32 %v97, %v97
    %102 = vst [vmem:[#allocation1] ss:$2 sm:$0xff] %v98
    %v103 = vld.sshfl [vmem:[#allocation1] sm:$0xff pattern:$0x75316420]
    %v104 = vld.sshfl [vmem:[#allocation1 + $0x8] sm:$0xff pattern:$0x75316420]
    %s105 = scalar_lea.vmem [#allocation1], 16
    %106 = vst [vmem:[%s105] ss:$2 sm:$0xff] %v99
    %v107 = vld.sshfl [vmem:[#allocation1 + $0x10] sm:$0xff pattern:$0x75316420]
    %v108 = vld.sshfl [vmem:[#allocation1 + $0x18] sm:$0xff pattern:$0x75316420]
    %v113 = vsel %vm46, %v103, 0.0
    %v114 = vrot.slane %v113, 4
    %v115 = vadd.f32 %v113, %v114
    %v116 = vrot.slane %v115, 2
    %v117 = vadd.f32 %v115, %v116
    %v118 = vrot.slane %v117, 1
    %v119 = vadd.f32 %v117, %v118
    %v120 = vsel %vm46, %v104, 0.0
    %v121 = vrot.slane %v120, 4
    %v122 = vadd.f32 %v120, %v121
    %v123 = vrot.slane %v122, 2
    %v124 = vadd.f32 %v122, %v123
    %v125 = vrot.slane %v124, 1
    %v126 = vadd.f32 %v124, %v125
    %v127 = vsel %vm46, %v107, 0.0
    %v128 = vrot.slane %v127, 4
    %v129 = vadd.f32 %v127, %v128
    %v130 = vrot.slane %v129, 2
    %v131 = vadd.f32 %v129, %v130
    %v132 = vrot.slane %v131, 1
    %v133 = vadd.f32 %v131, %v132
    %v134 = vsel %vm46, %v108, 0.0
    %v135 = vrot.slane %v134, 4
    %v136 = vadd.f32 %v134, %v135
    %v137 = vrot.slane %v136, 2
    %v138 = vadd.f32 %v136, %v137
    %v139 = vrot.slane %v138, 1
    %v140 = vadd.f32 %v138, %v139
    %v141 = vmul.f32 %v119, %v81
    %v142 = vmul.f32 %v126, %v81
    %v143 = vmul.f32 %v133, %v81
    %v144 = vmul.f32 %v140, %v81
    %v145 = vrsqrt.pop %v141
    %v146 = vmul.f32 %v145, %v141
    %v147 = vmul.f32 %v146, %v145
    %v148 = vmul.f32 0.5, %v147
    %v149 = vsub.f32 1.5, %v148
    %v150 = vmul.f32 %v145, %v149
    %v151 = vmul.f32 %v141, %v150
    %vm152 = vcmp.eq.f32.partialorder %v141, inf
    %v153 = vsel %vm152, %v141, %v151
    %vm154 = vcmp.eq.f32.partialorder %v141, 0.0
    %v155 = vand.u32 %v141, 2147483648
    %v156 = vsel %vm154, %v155, %v153
    %v157 = vrsqrt.pop %v142
    %v158 = vmul.f32 %v157, %v142
    %v159 = vmul.f32 %v158, %v157
    %v160 = vmul.f32 0.5, %v159
    %v161 = vsub.f32 1.5, %v160
    %v162 = vmul.f32 %v157, %v161
    %v163 = vmul.f32 %v142, %v162
    %vm164 = vcmp.eq.f32.partialorder %v142, inf
    %v165 = vsel %vm164, %v142, %v163
    %vm166 = vcmp.eq.f32.partialorder %v142, 0.0
    %v167 = vand.u32 %v142, 2147483648
    %v168 = vsel %vm166, %v167, %v165
    %v169 = vrsqrt.pop %v143
    %v170 = vmul.f32 %v169, %v143
    %v171 = vmul.f32 %v170, %v169
    %v172 = vmul.f32 0.5, %v171
    %v173 = vsub.f32 1.5, %v172
    %v174 = vmul.f32 %v169, %v173
    %v175 = vmul.f32 %v143, %v174
    %vm176 = vcmp.eq.f32.partialorder %v143, inf
    %v177 = vsel %vm176, %v143, %v175
    %vm178 = vcmp.eq.f32.partialorder %v143, 0.0
    %v179 = vand.u32 %v143, 2147483648
    %v180 = vsel %vm178, %v179, %v177
    %v181 = vrsqrt.pop %v144
    %v182 = vmul.f32 %v181, %v144
    %v183 = vmul.f32 %v182, %v181
    %v184 = vmul.f32 0.5, %v183
    %v185 = vsub.f32 1.5, %v184
    %v186 = vmul.f32 %v181, %v185
    %v187 = vmul.f32 %v144, %v186
    %vm188 = vcmp.eq.f32.partialorder %v144, inf
    %v189 = vsel %vm188, %v144, %v187
    %vm190 = vcmp.eq.f32.partialorder %v144, 0.0
    %v191 = vand.u32 %v144, 2147483648
    %v192 = vsel %vm190, %v191, %v189
    %v193 = vadd.f32 %v156, 1e-05
    %v194 = vadd.f32 %v168, 1e-05
    %v195 = vadd.f32 %v180, 1e-05
    %v196 = vadd.f32 %v192, 1e-05
    %v197 = vrcp.pop %v193
    %v198 = vmul.f32 %v193, %v197
    %v199 = vsub.f32 1.0, %v198
    %v200 = vmul.f32 %v197, %v199
    %v201 = vadd.f32 %v197, %v200
    %vm202 = vweird.f32 %v193
    %vm203 = vweird.f32 %v197
    %vm204 = vmor %vm202, %vm203
    %v205 = vsel %vm204, %v197, %v201
    %v206 = vand.u32 2147483647, %v193
    %vm207 = vcmp.eq.f32.partialorder %v206, 8.507059e+37
    %v208 = vand.u32 %v193, 2147483648
    %v209 = vor.u32 1.1754944e-38, %v208
    %v210 = vsel %vm207, %v209, %v205
    %v211 = vrcp.pop %v194
    %v212 = vmul.f32 %v194, %v211
    %v213 = vsub.f32 1.0, %v212
    %v214 = vmul.f32 %v211, %v213
    %v215 = vadd.f32 %v211, %v214
    %vm216 = vweird.f32 %v194
    %vm217 = vweird.f32 %v211
    %vm218 = vmor %vm216, %vm217
    %v219 = vsel %vm218, %v211, %v215
    %v220 = vand.u32 2147483647, %v194
    %vm221 = vcmp.eq.f32.partialorder %v220, 8.507059e+37
    %v222 = vand.u32 %v194, 2147483648
    %v223 = vor.u32 1.1754944e-38, %v222
    %v224 = vsel %vm221, %v223, %v219
    %v225 = vrcp.pop %v195
    %v226 = vmul.f32 %v195, %v225
    %v227 = vsub.f32 1.0, %v226
    %v228 = vmul.f32 %v225, %v227
    %v229 = vadd.f32 %v225, %v228
    %vm230 = vweird.f32 %v195
    %vm231 = vweird.f32 %v225
    %vm232 = vmor %vm230, %vm231
    %v233 = vsel %vm232, %v225, %v229
    %v234 = vand.u32 2147483647, %v195
    %vm235 = vcmp.eq.f32.partialorder %v234, 8.507059e+37
    %v236 = vand.u32 %v195, 2147483648
    %v237 = vor.u32 1.1754944e-38, %v236
    %v238 = vsel %vm235, %v237, %v233
    %v239 = vrcp.pop %v196
    %v240 = vmul.f32 %v196, %v239
    %v241 = vsub.f32 1.0, %v240
    %v242 = vmul.f32 %v239, %v241
    %v243 = vadd.f32 %v239, %v242
    %vm244 = vweird.f32 %v196
    %vm245 = vweird.f32 %v239
    %vm246 = vmor %vm244, %vm245
    %v247 = vsel %vm246, %v239, %v243
    %v248 = vand.u32 2147483647, %v196
    %vm249 = vcmp.eq.f32.partialorder %v248, 8.507059e+37
    %v250 = vand.u32 %v196, 2147483648
    %v251 = vor.u32 1.1754944e-38, %v250
    %v252 = vsel %vm249, %v251, %v247
    %v253 = vld [vmem:[%s1] sm:$0xf]
    %v254 = vld [vmem:[%s2] sm:$0xf]
    %v259 = vrot.slane %v224, 4
    %v260 = vrot.slane %v252, 4
    %v261 = vsel %vm46, %v210, %v259
    %v262 = vsel %vm46, %v238, %v260
    %v265 = vmul.f32 %v96, %v261
    %v266 = vmul.f32 %v97, %v262
    %268 = vset.pattern.permute.xlu0 0
    %269 = vperm.xlu0 %268, %v253
    %v270 = vpop.permute.xlu0 %269
    %v272 = vunpack.c.l.s4 839922192
    %v273 = vunpack.c.0.s8 %v272
    %v274 = vperm.slane %v270, %v273
    %v276 = vmul.f32 %v265, %v274
    %v277 = vmul.f32 %v266, %v274
    %279 = vset.pattern.permute.xlu0 0
    %280 = vperm.xlu0 %279, %v254
    %v281 = vpop.permute.xlu0 %280
    %v283 = vunpack.c.l.s4 839922192
    %v284 = vunpack.c.0.s8 %v283
    %v285 = vperm.slane %v281, %v284
    %v287 = vadd.f32 %v276, %v285
    %v288 = vadd.f32 %v277, %v285
    %289 = vst [vmem:[#allocation5] sm:$0xff] %v287
    %290 = vst [vmem:[#allocation5 + $0x8] sm:$0xff] %v288
    // Predicated region
    $region18: #{tpu_custom_call.1} parent=1 // pred_check
      _
    $region19: #{tpu_custom_call.1} parent=1 // pred_check_branch
      %292 = sbr.rel (0) target = $region21
    $region20: #{tpu_custom_call.1} parent=1 // pred_region
      %294 = vsyncadd [#allocation4], 0
      %s295 = sshll.u32 [#allocation5], 4
      %s296 = int_to_ptr.vmem [resolvable:$true] %s295
      %s297 = sshll.u32 %s3, 4
      %s298 = int_to_ptr.hbm [resolvable:$true] %s297
      %303 = dma.vmem_to_hbm [thread:$0]  %s296, 256, %s298, [#allocation4], 128, 128, 8
    $region21: #{tpu_custom_call.1} parent=1 // pred_fallthru
      _
    // Predicated region
    $region22: #{tpu_custom_call.1} parent=1 // pred_check
      _
    $region23: #{tpu_custom_call.1} parent=1 // pred_check_branch
      %305 = sbr.rel (0) target = $region25
    $region24: #{tpu_custom_call.1} parent=1 // pred_region
      %307 = dma.done [#allocation4], 256
    $region25: #{tpu_custom_call.1} parent=1 // pred_fallthru
      _
    %308 = vsyncpa [#allocation3], 1
    %309 = vsyncpa [#allocation4], 1

</llo_original>
